<compile_context>
chip_gen: v6e
topology: v6e:2x2x1
jax: 0.10.0
libtpu: 0.0.40
codegen_flags: <defaults>
</compile_context>

<pallas_src>
import math

import jax
import jax.numpy as jnp
import numpy as np
from jax.experimental import pallas as pl
from jax.experimental.pallas import tpu as pltpu

_LANES = 128           # lane-dense last dim -> unmasked vst
_MAX_TILE_ROWS = 2048  # 2048 * 128 * 4B = 1 MiB per tile buffer


def _identity_kernel(x_ref, o_ref):
    # Hot path: full-tile VMEM load + store (identity forward of observations).
    o_ref[...] = x_ref[...]


def _identity_copy_2d(flat: jax.Array) -> jax.Array:
    """Tiled, aliased identity copy of a 2D slab whose last dim is lane-dense."""
    rows, lanes = flat.shape
    tile_rows = min(rows, _MAX_TILE_ROWS)  # both multiples of 8 on this path
    grid = (pl.cdiv(rows, tile_rows),)
    return pl.pallas_call(
        _identity_kernel,
        out_shape=jax.ShapeDtypeStruct(flat.shape, flat.dtype),
        grid_spec=pltpu.PrefetchScalarGridSpec(
            num_scalar_prefetch=0,
            grid=grid,
            in_specs=[pl.BlockSpec((tile_rows, lanes), lambda i: (i, 0))],
            out_specs=pl.BlockSpec((tile_rows, lanes), lambda i: (i, 0)),
        ),
        compiler_params=pltpu.CompilerParams(
            dimension_semantics=("parallel",),
        ),
        input_output_aliases={0: 0},
    )(flat)


@jax.jit
def base_model_srl_get_states(observations: jax.Array) -> jax.Array:
    """Equivalent of BaseModelSRL.getStates(observations).

    observations: (B, C, H, W) float32, NCHW (PyTorch convention).
    returns:      (B, C, H, W) float32, identical values.
    """
    b, c, h, w = observations.shape
    total = b * c * h * w

    if total % (_LANES * 8) == 0:
        # Sublane-dense + lane-dense repack: (rows, 128) with rows % 8 == 0.
        rows = total // _LANES
        flat = observations.reshape(rows, _LANES)
        out_flat = _identity_copy_2d(flat)
    else:
        # Fallback for shapes that don't pack into (8k, 128): monolithic block
        # (block_shape == full array dims satisfies the (8,128) constraint).
        flat = observations.reshape(b, c * h * w)
        out_flat = pl.pallas_call(
            _identity_kernel,
            out_shape=jax.ShapeDtypeStruct(flat.shape, flat.dtype),
            grid_spec=pltpu.PrefetchScalarGridSpec(
                num_scalar_prefetch=0,
                grid=(1,),
                in_specs=[pl.BlockSpec(flat.shape, lambda i: (0, 0))],
                out_specs=pl.BlockSpec(flat.shape, lambda i: (0, 0)),
            ),
            compiler_params=pltpu.CompilerParams(
                dimension_semantics=("arbitrary",),
            ),
            input_output_aliases={0: 0},
        )(flat)

    return out_flat.reshape(b, c, h, w)


class BaseModelSRLPallas:
    """JAX/Pallas mirror of the PyTorch BaseModelSRL base class."""

    def __init__(self, state_dim: int = 2, img_shape=(3, 224, 224)):
        # Base class allocates no parameters.
        self.state_dim = state_dim
        self.img_shape = img_shape

    def get_states(self, observations: jax.Array) -> jax.Array:
        return self.forward(observations)

    def forward(self, x: jax.Array) -> jax.Array:
        # Abstract in PyTorch; here the defined data path is the identity
        # pass-through of observations executed via the Pallas kernel.
        return base_model_srl_get_states(x)


if __name__ == "__main__":
    key = jax.random.PRNGKey(0)
    # Small shapes consistent with the module's img_shape convention (C, H, W),
    # scaled down: batch=2, channels=4, spatial=16.
    obs = jax.random.normal(key, (2, 4, 16, 16), dtype=jnp.float32)
    # Host-side reference taken before the kernel runs (robust even if the
    # caller later chooses to donate the input buffer for true aliasing).
    obs_host = np.asarray(obs)

    model = BaseModelSRLPallas(state_dim=2, img_shape=(4, 16, 16))
    out = jax.block_until_ready(model.get_states(obs))

    assert out.shape == obs_host.shape
    assert out.dtype == jnp.float32
    assert np.allclose(np.asarray(out), obs_host)
    print("KERNEL_OK")
</pallas_src>

<mosaic_0001>
module attributes {stable_mosaic.version = 11 : i64} {
  func.func @_identity_kernel(%arg0: i32, %arg1: memref<16x128xf32, #tpu.memory_space<vmem>>, %arg2: memref<16x128xf32, #tpu.memory_space<vmem>>) attributes {dimension_semantics = [#tpu.dimension_semantics<parallel>], iteration_bounds = array<i64: 1>, scalar_prefetch = 0 : i64, scratch_operands = 0 : i64, tpu.core_type = #tpu.core_type<tc>, window_params = [{transform_indices = @transform_0, window_bounds = array<i64: 16, 128>}, {transform_indices = @transform_1, window_bounds = array<i64: 16, 128>}]} {
    %c0 = arith.constant 0 : index
    %c0_0 = arith.constant 0 : index
    %0 = vector.load %arg1[%c0, %c0_0] : memref<16x128xf32, #tpu.memory_space<vmem>>, vector<16x128xf32>
    %c0_1 = arith.constant 0 : index
    %c0_2 = arith.constant 0 : index
    %1 = vector.load %arg2[%c0_1, %c0_2] : memref<16x128xf32, #tpu.memory_space<vmem>>, vector<16x128xf32>
    tpu.vector_store %arg2[%c0_1, %c0_2], %0 {strides = array<i32>} : memref<16x128xf32, #tpu.memory_space<vmem>>, vector<16x128xf32>,
    return
  }
  func.func @transform_0(%arg0: i32) -> (i32, i32) {
    %c0_i32 = arith.constant 0 : i32
    %c0_i32_0 = arith.constant 0 : i32
    return %arg0, %c0_i32 : i32, i32
  }
  func.func @transform_1(%arg0: i32) -> (i32, i32) {
    %c0_i32 = arith.constant 0 : i32
    %c0_i32_0 = arith.constant 0 : i32
    return %arg0, %c0_i32 : i32, i32
  }
}

</mosaic_0001>

<llo_original>
// kernel: base_model_srl_get_states.1
$region0: #{base_model_srl_get_states.1}
  #allocation0 [shape = 'u32[]', space=smem, size = 0x4, offset = 0x4, fixed_abs, tag = 'smem constant byte address 0x4 - core index']
  #allocation1 [shape = 'u32[144,128]{1,0:T(1,128)}', space=vmem, size = 0x12000, scoped, tag = 'internal scratch']
  %s0 = inlined_call_operand.vmem [shape: f32[16,128], index: 0, kind: input, shape index: {}, may-alias: {0,1}]
  %s1 = inlined_call_operand.vmem [shape: f32[16,128], index: 1, kind: output, shape index: {}, may-alias: {0,1}]
  %s2 = sld [smem:[#allocation0]]
  $region14: #{base_model_srl_get_states.1} parent=0
    _
  %s4 = ssub.s32 1, %s2
  %s5 = scalar_select 0, %s4, %s2
  // Predicated region
  $region2: #{base_model_srl_get_states.1} parent=0 // pred_check
    _
  $region3: #{base_model_srl_get_states.1} parent=0 // pred_check_branch
    %7 = sbr.rel (0) target = $region5
  $region4: #{base_model_srl_get_states.1} parent=0 // pred_region
    _
  $region5: #{base_model_srl_get_states.1} parent=0 // pred_fallthru
    _
  %v8 = vld [vmem:[%s0] sm:$0xff]
  %v9 = vld [vmem:[%s0 + $0x8] sm:$0xff]
  %10 = vst [vmem:[%s1] sm:$0xff] %v8
  %11 = vst [vmem:[%s1 + $0x8] sm:$0xff] %v9
  // Predicated region
  $region6: #{base_model_srl_get_states.1} parent=0 // pred_check
    _
  $region7: #{base_model_srl_get_states.1} parent=0 // pred_check_branch
    %13 = sbr.rel (0) target = $region9
  $region8: #{base_model_srl_get_states.1} parent=0 // pred_region
    _
  $region9: #{base_model_srl_get_states.1} parent=0 // pred_fallthru
    _
  // Predicated region
  $region10: #{base_model_srl_get_states.1} parent=0 // pred_check
    _
  $region11: #{base_model_srl_get_states.1} parent=0 // pred_check_branch
    %15 = sbr.rel (0) target = $region13
  $region12: #{base_model_srl_get_states.1} parent=0 // pred_region
    _
  $region13: #{base_model_srl_get_states.1} parent=0 // pred_fallthru
    _

</llo_original>
